<compile_context>
chip_gen: v5e
topology: v5e:2x2
jax: 0.10.0
libtpu: 0.0.40
codegen_flags: <defaults>
</compile_context>

<pallas_src>
import jax
import jax.numpy as jnp
from jax.experimental import pallas as pl
from jax.experimental.pallas import tpu as pltpu

_LANE = 128


def _round_up(x, m):
    return ((x + m - 1) // m) * m


def _sublane_multiple(dtype):
    # f32 -> 8 sublanes, bf16/f16 -> 16, int8/fp8 -> 32 (packed sublane tiling).
    return max(8, 32 // jnp.dtype(dtype).itemsize)


def _default_n_parts():
    # 2 TensorCores per chip on v7x-class devices; 1 on v5e / v6e.
    try:
        kind = jax.devices()[0].device_kind.lower()
    except Exception:
        return 1
    return 2 if "v7" in kind else 1


def masked_l1_loss(pred, target, weight=None, *, tm=8192, n_parts=None):
    """Mean of |target - pred| over elements where target > 0.

    Matches PE_FL.criteria.MaskedL1Loss.forward.  NOTE: when no element is
    valid the result is NaN (0/0), same as the PyTorch reference.  The
    `weight` argument is accepted and ignored, as in the reference forward.
    """
    del weight  # unused by the reference forward
    assert pred.ndim == target.ndim, "inconsistent dimensions"
    assert pred.shape == target.shape, "inconsistent dimensions"

    if n_parts is None:
        n_parts = _default_n_parts()

    p = pred.reshape(-1)
    t = target.reshape(-1)
    total = p.shape[0]
    assert total > 0, "empty input"

    # 128-lane alignment.  For typical depth-map shapes total % 128 == 0 and
    # NO copy is made (reshape of a contiguous array is free).
    rem = total % _LANE
    main = total - rem

    tail_sum = jnp.float32(0.0)
    tail_cnt = jnp.int32(0)
    if rem:
        p_tail = p[main:].astype(jnp.float32)
        t_tail = t[main:].astype(jnp.float32)
        tail_valid = t_tail > 0.0
        tail_sum = jnp.sum(jnp.where(tail_valid, jnp.abs(t_tail - p_tail), 0.0))
        tail_cnt = jnp.sum(tail_valid.astype(jnp.int32))
        if main == 0:
            # Fewer than 128 elements: nothing for the kernel to do.
            return tail_sum / tail_cnt.astype(jnp.float32)
        # TODO(synk): rare path; the prefix slice may still materialize a copy
        # of the prefix in XLA (still cheaper than padding both full arrays).
        p = p[:main]
        t = t[:main]

    n_rows = main // _LANE
    p2 = p.reshape(n_rows, _LANE)
    t2 = t.reshape(n_rows, _LANE)

    sub = max(_sublane_multiple(p2.dtype), _sublane_multiple(t2.dtype))
    tm_eff = min(_round_up(tm, sub), _round_up(n_rows, sub))
    n_tiles = -(-n_rows // tm_eff)
    n_parts = max(1, min(n_parts, n_tiles))
    tiles_per_part = -(-n_tiles // n_parts)
    groups = tm_eff // 8  # number of (8,128) vreg groups per input block

    def kernel(pred_ref, tgt_ref, sum_out_ref, cnt_out_ref, acc_sum, acc_cnt):
        i = pl.program_id(0)  # part (parallel / megacore axis)
        j = pl.program_id(1)  # row-tile within the part (reduction axis)

        @pl.when(j == 0)
        def _():
            acc_sum[...] = jnp.zeros_like(acc_sum)
            acc_cnt[...] = jnp.zeros_like(acc_cnt)

        t_blk = tgt_ref[...].astype(jnp.float32)
        p_blk = pred_ref[...].astype(jnp.float32)

        # Logical (un-clamped) tile index; >= n_tiles for clamped duplicates.
        tile_idx = i * tiles_per_part + j
        is_boundary = tile_idx >= n_tiles - 1

        def accumulate(valid):
            diff = jnp.where(valid, jnp.abs(t_blk - p_blk), 0.0)
            cnt = valid.astype(jnp.float32)
            # Fold (tm,128) -> (8,128) with pure vreg adds (VPU), then add
            # into the tiny VMEM-resident scratch accumulators.
            acc_sum[...] += diff.reshape(groups, 8, _LANE).sum(axis=0)
            acc_cnt[...] += cnt.reshape(groups, 8, _LANE).sum(axis=0)

        @pl.when(jnp.logical_not(is_boundary))
        def _():
            # Fast path: interior tile, every row is a real row.
            accumulate(t_blk > 0.0)

        @pl.when(is_boundary)
        def _():
            # Last real tile (ragged trailing rows) or a clamped duplicate
            # tile of the last part: also mask out rows >= n_rows.
            row_ids = tile_idx * tm_eff + jax.lax.broadcasted_iota(
                jnp.int32, (tm_eff, _LANE), 0)
            accumulate((t_blk > 0.0) & (row_ids < n_rows))

        @pl.when(j == tiles_per_part - 1)
        def _():
            # Final reduce once per part (XLU; free in an HBM-bound kernel).
            # Counts stay per-lane so the wrapper can sum them exactly as int32.
            sum_out_ref[...] = jnp.sum(acc_sum[...], keepdims=True)
            cnt_out_ref[...] = jnp.sum(acc_cnt[...], axis=0, keepdims=True)

    def in_map(i, j):
        # Clamp so the DMA never addresses past the last real tile.
        return (jnp.minimum(i * tiles_per_part + j, n_tiles - 1), 0)

    # Double-buffered input blocks + margin; well under v7x's 64 MiB per TC.
    in_block_bytes = tm_eff * _LANE * (p2.dtype.itemsize + t2.dtype.itemsize)
    vmem_limit = int(min(64 * 1024 * 1024,
                         max(16 * 1024 * 1024, 2 * in_block_bytes + (4 << 20))))

    sums, cnts = pl.pallas_call(
        kernel,
        out_shape=(
            jax.ShapeDtypeStruct((n_parts, 1, 1), jnp.float32),
            jax.ShapeDtypeStruct((n_parts, 1, _LANE), jnp.float32),
        ),
        grid_spec=pltpu.PrefetchScalarGridSpec(
            num_scalar_prefetch=0,
            grid=(n_parts, tiles_per_part),
            in_specs=[
                # TODO(synk): optionally sweep pipeline_mode=pl.Buffered(3).
                pl.BlockSpec((tm_eff, _LANE), in_map),
                pl.BlockSpec((tm_eff, _LANE), in_map),
            ],
            out_specs=[
                pl.BlockSpec((None, 1, 1), lambda i, j: (i, 0, 0)),
                pl.BlockSpec((None, 1, _LANE), lambda i, j: (i, 0, 0)),
            ],
            scratch_shapes=[
                pltpu.VMEM((8, _LANE), jnp.float32),
                pltpu.VMEM((8, _LANE), jnp.float32),
            ],
        ),
        compiler_params=pltpu.CompilerParams(
            dimension_semantics=("parallel", "arbitrary"),
            vmem_limit_bytes=vmem_limit,
        ),
    )(p2, t2)

    loss_sum = jnp.sum(sums) + tail_sum
    # Per-lane counts are exact small integers held in f32; sum as int32.
    # TODO(synk): int32 overflows past ~2.1B valid elements.
    loss_cnt = jnp.sum(cnts.astype(jnp.int32)) + tail_cnt
    # 0/0 -> NaN when no element is valid, same as the PyTorch reference.
    return loss_sum / loss_cnt.astype(jnp.float32)


def _ref_loss(pred, target):
    valid = target > 0
    return jnp.sum(jnp.abs(target - pred) * valid) / jnp.sum(valid)


if __name__ == "__main__":
    key = jax.random.PRNGKey(0)
    k1, k2, k3, k4 = jax.random.split(key, 4)

    # NCHW, matching the PyTorch module's typical depth-prediction inputs.
    pred = jax.random.normal(k1, (2, 4, 16, 16), dtype=jnp.float32)
    target = jax.random.normal(k2, (2, 4, 16, 16), dtype=jnp.float32)
    loss = jax.block_until_ready(masked_l1_loss(pred, target))
    ref = _ref_loss(pred, target)
    assert jnp.allclose(loss, ref, rtol=1e-6, atol=1e-6), (loss, ref)

    # Multi-tile grid with a ragged trailing row-tile and clamped duplicate
    # tiles of the last part (small tile + 2 parts forced to exercise paths).
    pred_l = jax.random.normal(k3, (2, 1, 150, 1024), dtype=jnp.float32)
    target_l = jax.random.normal(k4, (2, 1, 150, 1024), dtype=jnp.float32)
    loss_l = jax.block_until_ready(
        masked_l1_loss(pred_l, target_l, tm=512, n_parts=2))
    ref_l = _ref_loss(pred_l, target_l)
    assert jnp.allclose(loss_l, ref_l, rtol=1e-5, atol=1e-5), (loss_l, ref_l)

    # total % 128 != 0: aligned-prefix kernel + tiny tail reduction.
    k5, k6 = jax.random.split(k3)
    pred_t = jax.random.normal(k5, (3, 5, 7, 11), dtype=jnp.float32)
    target_t = jax.random.normal(k6, (3, 5, 7, 11), dtype=jnp.float32)
    loss_t = jax.block_until_ready(masked_l1_loss(pred_t, target_t))
    ref_t = _ref_loss(pred_t, target_t)
    assert jnp.allclose(loss_t, ref_t, rtol=1e-5, atol=1e-5), (loss_t, ref_t)

    print("KERNEL_OK")
</pallas_src>

<mosaic_0001>
module attributes {stable_mosaic.version = 11 : i64} {
  func.func @kernel(%arg0: i32, %arg1: i32, %arg2: memref<16x128xf32, #tpu.memory_space<vmem>>, %arg3: memref<16x128xf32, #tpu.memory_space<vmem>>, %arg4: memref<1x1x1xf32, #tpu.memory_space<vmem>>, %arg5: memref<1x1x128xf32, #tpu.memory_space<vmem>>, %arg6: memref<8x128xf32, #tpu.memory_space<vmem>>, %arg7: memref<8x128xf32, #tpu.memory_space<vmem>>) attributes {dimension_semantics = [#tpu.dimension_semantics<parallel>, #tpu.dimension_semantics<arbitrary>], iteration_bounds = array<i64: 1, 1>, scalar_prefetch = 0 : i64, scratch_operands = 2 : i64, tpu.core_type = #tpu.core_type<tc>, window_params = [{transform_indices = @transform_0, window_bounds = array<i64: 16, 128>}, {transform_indices = @transform_1, window_bounds = array<i64: 16, 128>}, {transform_indices = @transform_2, window_bounds = array<i64: 1, 1, 1>}, {transform_indices = @transform_3, window_bounds = array<i64: 1, 1, 128>}]} {
    %c0_i32 = arith.constant 0 : i32
    %0 = arith.cmpi eq, %arg1, %c0_i32 : i32
    %1 = arith.extui %0 : i1 to i32
    %c0_i32_0 = arith.constant 0 : i32
    %2 = arith.cmpi ne, %1, %c0_i32_0 : i32
    scf.if %2 {
      %cst = arith.constant 0.000000e+00 : f32
      %16 = vector.broadcast %cst : f32 to vector<8x128xf32>
      %c0_9 = arith.constant 0 : index
      %c0_10 = arith.constant 0 : index
      %17 = vector.load %arg6[%c0_9, %c0_10] : memref<8x128xf32, #tpu.memory_space<vmem>>, vector<8x128xf32>
      tpu.vector_store %arg6[%c0_9, %c0_10], %16 {strides = array<i32>} : memref<8x128xf32, #tpu.memory_space<vmem>>, vector<8x128xf32>,
      %cst_11 = arith.constant 0.000000e+00 : f32
      %18 = vector.broadcast %cst_11 : f32 to vector<8x128xf32>
      %c0_12 = arith.constant 0 : index
      %c0_13 = arith.constant 0 : index
      %19 = vector.load %arg7[%c0_12, %c0_13] : memref<8x128xf32, #tpu.memory_space<vmem>>, vector<8x128xf32>
      tpu.vector_store %arg7[%c0_12, %c0_13], %18 {strides = array<i32>} : memref<8x128xf32, #tpu.memory_space<vmem>>, vector<8x128xf32>,
    } else {
    }
    %c0 = arith.constant 0 : index
    %c0_1 = arith.constant 0 : index
    %3 = vector.load %arg3[%c0, %c0_1] : memref<16x128xf32, #tpu.memory_space<vmem>>, vector<16x128xf32>
    %c0_2 = arith.constant 0 : index
    %c0_3 = arith.constant 0 : index
    %4 = vector.load %arg2[%c0_2, %c0_3] : memref<16x128xf32, #tpu.memory_space<vmem>>, vector<16x128xf32>
    %c1_i32 = arith.constant 1 : i32
    %5 = arith.muli %arg0, %c1_i32 : i32
    %6 = arith.addi %5, %arg1 : i32
    %c0_i32_4 = arith.constant 0 : i32
    %7 = arith.cmpi sge, %6, %c0_i32_4 : i32
    %true = arith.constant true
    %8 = arith.xori %7, %true : i1
    %9 = arith.extui %8 : i1 to i32
    %c0_i32_5 = arith.constant 0 : i32
    %10 = arith.cmpi ne, %9, %c0_i32_5 : i32
    scf.if %10 {
      %cst = arith.constant 0.000000e+00 : f32
      %16 = vector.broadcast %cst : f32 to vector<16x128xf32>
      %17 = arith.cmpf ogt, %3, %16 : vector<16x128xf32>
      %18 = arith.subf %3, %4 : vector<16x128xf32>
      %19 = math.absf %18 : vector<16x128xf32>
      %cst_9 = arith.constant 0.000000e+00 : f32
      %20 = vector.broadcast %cst_9 : f32 to vector<16x128xf32>
      %21 = arith.select %17, %19, %20 : vector<16x128xi1>, vector<16x128xf32>
      %22 = arith.extui %17 : vector<16x128xi1> to vector<16x128xi32>
      %23 = arith.sitofp %22 : vector<16x128xi32> to vector<16x128xf32>
      %c0_10 = arith.constant 0 : index
      %c0_11 = arith.constant 0 : index
      %24 = vector.load %arg6[%c0_10, %c0_11] : memref<8x128xf32, #tpu.memory_space<vmem>>, vector<8x128xf32>
      %25 = vector.shape_cast %21 : vector<16x128xf32> to vector<2x8x128xf32>
      %cst_12 = arith.constant dense<0.000000e+00> : vector<8x128xf32>
      %26 = vector.multi_reduction <add>, %25, %cst_12 [0] : vector<2x8x128xf32> to vector<8x128xf32>
      %27 = arith.addf %24, %26 : vector<8x128xf32>
      %c0_13 = arith.constant 0 : index
      %c0_14 = arith.constant 0 : index
      %28 = vector.load %arg6[%c0_13, %c0_14] : memref<8x128xf32, #tpu.memory_space<vmem>>, vector<8x128xf32>
      tpu.vector_store %arg6[%c0_13, %c0_14], %27 {strides = array<i32>} : memref<8x128xf32, #tpu.memory_space<vmem>>, vector<8x128xf32>,
      %c0_15 = arith.constant 0 : index
      %c0_16 = arith.constant 0 : index
      %29 = vector.load %arg7[%c0_15, %c0_16] : memref<8x128xf32, #tpu.memory_space<vmem>>, vector<8x128xf32>
      %30 = vector.shape_cast %23 : vector<16x128xf32> to vector<2x8x128xf32>
      %cst_17 = arith.constant dense<0.000000e+00> : vector<8x128xf32>
      %31 = vector.multi_reduction <add>, %30, %cst_17 [0] : vector<2x8x128xf32> to vector<8x128xf32>
      %32 = arith.addf %29, %31 : vector<8x128xf32>
      %c0_18 = arith.constant 0 : index
      %c0_19 = arith.constant 0 : index
      %33 = vector.load %arg7[%c0_18, %c0_19] : memref<8x128xf32, #tpu.memory_space<vmem>>, vector<8x128xf32>
      tpu.vector_store %arg7[%c0_18, %c0_19], %32 {strides = array<i32>} : memref<8x128xf32, #tpu.memory_space<vmem>>, vector<8x128xf32>,
    } else {
    }
    %11 = arith.extui %7 : i1 to i32
    %c0_i32_6 = arith.constant 0 : i32
    %12 = arith.cmpi ne, %11, %c0_i32_6 : i32
    scf.if %12 {
      %c16_i32 = arith.constant 16 : i32
      %16 = arith.muli %6, %c16_i32 : i32
      %17 = tpu.iota {dimensions = array<i32: 0>} : vector<16x128xi32>
      %18 = vector.broadcast %16 : i32 to vector<16x128xi32>
      %19 = arith.addi %18, %17 : vector<16x128xi32>
      %cst = arith.constant 0.000000e+00 : f32
      %20 = vector.broadcast %cst : f32 to vector<16x128xf32>
      %21 = arith.cmpf ogt, %3, %20 : vector<16x128xf32>
      %c16_i32_9 = arith.constant 16 : i32
      %22 = vector.broadcast %c16_i32_9 : i32 to vector<16x128xi32>
      %23 = arith.cmpi slt, %19, %22 : vector<16x128xi32>
      %24 = arith.andi %21, %23 : vector<16x128xi1>
      %25 = arith.subf %3, %4 : vector<16x128xf32>
      %26 = math.absf %25 : vector<16x128xf32>
      %cst_10 = arith.constant 0.000000e+00 : f32
      %27 = vector.broadcast %cst_10 : f32 to vector<16x128xf32>
      %28 = arith.select %24, %26, %27 : vector<16x128xi1>, vector<16x128xf32>
      %29 = arith.extui %24 : vector<16x128xi1> to vector<16x128xi32>
      %30 = arith.sitofp %29 : vector<16x128xi32> to vector<16x128xf32>
      %c0_11 = arith.constant 0 : index
      %c0_12 = arith.constant 0 : index
      %31 = vector.load %arg6[%c0_11, %c0_12] : memref<8x128xf32, #tpu.memory_space<vmem>>, vector<8x128xf32>
      %32 = vector.shape_cast %28 : vector<16x128xf32> to vector<2x8x128xf32>
      %cst_13 = arith.constant dense<0.000000e+00> : vector<8x128xf32>
      %33 = vector.multi_reduction <add>, %32, %cst_13 [0] : vector<2x8x128xf32> to vector<8x128xf32>
      %34 = arith.addf %31, %33 : vector<8x128xf32>
      %c0_14 = arith.constant 0 : index
      %c0_15 = arith.constant 0 : index
      %35 = vector.load %arg6[%c0_14, %c0_15] : memref<8x128xf32, #tpu.memory_space<vmem>>, vector<8x128xf32>
      tpu.vector_store %arg6[%c0_14, %c0_15], %34 {strides = array<i32>} : memref<8x128xf32, #tpu.memory_space<vmem>>, vector<8x128xf32>,
      %c0_16 = arith.constant 0 : index
      %c0_17 = arith.constant 0 : index
      %36 = vector.load %arg7[%c0_16, %c0_17] : memref<8x128xf32, #tpu.memory_space<vmem>>, vector<8x128xf32>
      %37 = vector.shape_cast %30 : vector<16x128xf32> to vector<2x8x128xf32>
      %cst_18 = arith.constant dense<0.000000e+00> : vector<8x128xf32>
      %38 = vector.multi_reduction <add>, %37, %cst_18 [0] : vector<2x8x128xf32> to vector<8x128xf32>
      %39 = arith.addf %36, %38 : vector<8x128xf32>
      %c0_19 = arith.constant 0 : index
      %c0_20 = arith.constant 0 : index
      %40 = vector.load %arg7[%c0_19, %c0_20] : memref<8x128xf32, #tpu.memory_space<vmem>>, vector<8x128xf32>
      tpu.vector_store %arg7[%c0_19, %c0_20], %39 {strides = array<i32>} : memref<8x128xf32, #tpu.memory_space<vmem>>, vector<8x128xf32>,
    } else {
    }
    %c0_i32_7 = arith.constant 0 : i32
    %13 = arith.cmpi eq, %arg1, %c0_i32_7 : i32
    %14 = arith.extui %13 : i1 to i32
    %c0_i32_8 = arith.constant 0 : i32
    %15 = arith.cmpi ne, %14, %c0_i32_8 : i32
    scf.if %15 {
      %c0_9 = arith.constant 0 : index
      %c0_10 = arith.constant 0 : index
      %16 = vector.load %arg6[%c0_9, %c0_10] : memref<8x128xf32, #tpu.memory_space<vmem>>, vector<8x128xf32>
      %17 = vector.shape_cast %16 : vector<8x128xf32> to vector<1x8x128xf32>
      %cst = arith.constant dense<0.000000e+00> : vector<1xf32>
      %18 = vector.multi_reduction <add>, %17, %cst [1, 2] : vector<1x8x128xf32> to vector<1xf32>
      %19 = vector.shape_cast %18 : vector<1xf32> to vector<1x1x1xf32>
      %20 = vector.extract %19[0, 0, 0] : f32 from vector<1x1x1xf32>
      %21 = vector.broadcast %20 : f32 to vector<1x1xf32>
      %c0_11 = arith.constant 0 : index
      %c0_12 = arith.constant 0 : index
      %c0_13 = arith.constant 0 : index
      %22 = vector.load %arg4[%c0_11, %c0_12, %c0_13] : memref<1x1x1xf32, #tpu.memory_space<vmem>>, vector<1x1x1xf32>
      %23 = vector.shape_cast %22 : vector<1x1x1xf32> to vector<1x1xf32>
      %24 = vector.shape_cast %21 : vector<1x1xf32> to vector<1x1x1xf32>
      tpu.vector_store %arg4[%c0_11, %c0_12, %c0_13], %24 {strides = array<i32>} : memref<1x1x1xf32, #tpu.memory_space<vmem>>, vector<1x1x1xf32>,
      %c0_14 = arith.constant 0 : index
      %c0_15 = arith.constant 0 : index
      %25 = vector.load %arg7[%c0_14, %c0_15] : memref<8x128xf32, #tpu.memory_space<vmem>>, vector<8x128xf32>
      %cst_16 = arith.constant dense<0.000000e+00> : vector<128xf32>
      %26 = vector.multi_reduction <add>, %25, %cst_16 [0] : vector<8x128xf32> to vector<128xf32>
      %27 = vector.shape_cast %26 : vector<128xf32> to vector<1x128xf32>
      %c0_17 = arith.constant 0 : index
      %c0_18 = arith.constant 0 : index
      %c0_19 = arith.constant 0 : index
      %28 = vector.load %arg5[%c0_17, %c0_18, %c0_19] : memref<1x1x128xf32, #tpu.memory_space<vmem>>, vector<1x1x128xf32>
      %29 = vector.shape_cast %28 : vector<1x1x128xf32> to vector<1x128xf32>
      %30 = vector.shape_cast %27 : vector<1x128xf32> to vector<1x1x128xf32>
      tpu.vector_store %arg5[%c0_17, %c0_18, %c0_19], %30 {strides = array<i32>} : memref<1x1x128xf32, #tpu.memory_space<vmem>>, vector<1x1x128xf32>,
    } else {
    }
    return
  }
  func.func @transform_0(%arg0: i32, %arg1: i32) -> (i32, i32) {
    %c1_i32 = arith.constant 1 : i32
    %0 = arith.muli %arg0, %c1_i32 : i32
    %1 = arith.addi %0, %arg1 : i32
    %c0_i32 = arith.constant 0 : i32
    %2 = arith.minsi %1, %c0_i32 : i32
    %c0_i32_0 = arith.constant 0 : i32
    %c0_i32_1 = arith.constant 0 : i32
    return %2, %c0_i32_0 : i32, i32
  }
  func.func @transform_1(%arg0: i32, %arg1: i32) -> (i32, i32) {
    %c1_i32 = arith.constant 1 : i32
    %0 = arith.muli %arg0, %c1_i32 : i32
    %1 = arith.addi %0, %arg1 : i32
    %c0_i32 = arith.constant 0 : i32
    %2 = arith.minsi %1, %c0_i32 : i32
    %c0_i32_0 = arith.constant 0 : i32
    %c0_i32_1 = arith.constant 0 : i32
    return %2, %c0_i32_0 : i32, i32
  }
  func.func @transform_2(%arg0: i32, %arg1: i32) -> (i32, i32, i32) {
    %c0_i32 = arith.constant 0 : i32
    %c0_i32_0 = arith.constant 0 : i32
    %c0_i32_1 = arith.constant 0 : i32
    return %arg0, %c0_i32, %c0_i32_0 : i32, i32, i32
  }
  func.func @transform_3(%arg0: i32, %arg1: i32) -> (i32, i32, i32) {
    %c0_i32 = arith.constant 0 : i32
    %c0_i32_0 = arith.constant 0 : i32
    %c0_i32_1 = arith.constant 0 : i32
    return %arg0, %c0_i32, %c0_i32_0 : i32, i32, i32
  }
}

</mosaic_0001>

<llo_original>
// kernel: tpu_custom_call.1
$region0: #{tpu_custom_call.1}
  #allocation0 [shape = 'u32[]', space=smem, size = 0x4, offset = 0x4, fixed_abs, tag = 'smem constant byte address 0x4 - core index']
  #allocation1 [shape = 'u32[72,128]{1,0:T(1,128)}', space=vmem, size = 0x9000, scoped, tag = 'internal scratch']
  #allocation2 [shape = 'f32[8,128]{1,0:T(8,128)}', space=vmem, size = 0x1000, scoped, tag = 'scratch operand']
  #allocation3 [shape = 'f32[8,128]{1,0:T(8,128)}', space=vmem, size = 0x1000, scoped, tag = 'scratch operand']
  %s0 = inlined_call_operand.hbm [shape: f32[16,128], index: 0, kind: input, shape index: {}]
  %s1 = inlined_call_operand.hbm [shape: f32[16,128], index: 1, kind: input, shape index: {}]
  %s2 = inlined_call_operand.hbm [shape: f32[1,1,1], index: 2, kind: output, shape index: {0}]
  %s3 = inlined_call_operand.hbm [shape: f32[1,1,128], index: 3, kind: output, shape index: {1}]
  %4 = xla_tuple %s2, %s3
  %s5 = sld [smem:[#allocation0]]
  $region50: #{tpu_custom_call.1} parent=0
    _
  %s7 = ssub.s32 1, %s5
  %s8 = scalar_select 0, %s7, %s5
  $region1: #{tpu_custom_call.1} parent=0
    #allocation4 [shape = 'u8[8192]{0}', space=vmem, size = 0x2000, scoped, tag = 'input window, operand 0, single buffered']
    #allocation5 [shape = 's32[1]{0}', space=sflag, size = 0x4, scoped, tag = 'scoped memory for tpu_custom_call.1']
    #allocation6 [shape = 's32[1]{0}', space=sflag, size = 0x4, scoped, tag = 'scoped memory for tpu_custom_call.1']
    #allocation7 [shape = 'u8[8192]{0}', space=vmem, size = 0x2000, scoped, tag = 'input window, operand 1, single buffered']
    #allocation8 [shape = 's32[1]{0}', space=sflag, size = 0x4, scoped, tag = 'scoped memory for tpu_custom_call.1']
    #allocation9 [shape = 'u8[512]{0}', space=vmem, size = 0x400, scoped, tag = 'output window, operand 0, single buffered']
    #allocation10 [shape = 'u8[512]{0}', space=vmem, size = 0x400, scoped, tag = 'output window, operand 1, single buffered']
    #allocation11 [shape = 's32[1]{0}', space=sflag, size = 0x4, scoped, tag = 'scoped memory for tpu_custom_call.1']
    %9 = vsyncpa [#allocation5], 0
    %10 = vsyncpa [#allocation8], 0
    %11 = vsyncpa [#allocation6], 0
    %12 = vsyncpa [#allocation11], 0
    // Predicated region
    $region2: #{tpu_custom_call.1} parent=1 // pred_check
      _
    $region3: #{tpu_custom_call.1} parent=1 // pred_check_branch
      %14 = sbr.rel (0) target = $region5
    $region4: #{tpu_custom_call.1} parent=1 // pred_region
      %s15 = sadd.s32 0, 0
      %p16 = scmp.lt.s32.totalorder %s15, 0
      %s17 = scalar_select %p16, %s15, 0
      %s18 = smul.u32 2, %s17
      %20 = vsyncadd [#allocation5], 0
      %s21 = smul.addr %s18, 8
      %s22 = scalar_lea.hbm %s0, %s21
      %s23 = sshll.u32 %s22, 4
      %s24 = int_to_ptr.hbm [resolvable:$true] %s23
      %s25 = sshll.u32 [#allocation4], 4
      %s26 = int_to_ptr.vmem [resolvable:$true] %s25
      %31 = dma.hbm_to_vmem [thread:$0]  %s24, 256, %s26, [#allocation5], 128, 128, 8
    $region5: #{tpu_custom_call.1} parent=1 // pred_fallthru
      _
    // Predicated region
    $region6: #{tpu_custom_call.1} parent=1 // pred_check
      _
    $region7: #{tpu_custom_call.1} parent=1 // pred_check_branch
      %33 = sbr.rel (0) target = $region9
    $region8: #{tpu_custom_call.1} parent=1 // pred_region
      %s34 = sadd.s32 0, 0
      %p35 = scmp.lt.s32.totalorder %s34, 0
      %s36 = scalar_select %p35, %s34, 0
      %s37 = smul.u32 2, %s36
      %39 = vsyncadd [#allocation8], 0
      %s40 = smul.addr %s37, 8
      %s41 = scalar_lea.hbm %s1, %s40
      %s42 = sshll.u32 %s41, 4
      %s43 = int_to_ptr.hbm [resolvable:$true] %s42
      %s44 = sshll.u32 [#allocation7], 4
      %s45 = int_to_ptr.vmem [resolvable:$true] %s44
      %50 = dma.hbm_to_vmem [thread:$0]  %s43, 256, %s45, [#allocation8], 128, 128, 8
    $region9: #{tpu_custom_call.1} parent=1 // pred_fallthru
      _
    // Predicated region
    $region10: #{tpu_custom_call.1} parent=1 // pred_check
      _
    $region11: #{tpu_custom_call.1} parent=1 // pred_check_branch
      %52 = sbr.rel (0) target = $region13
    $region12: #{tpu_custom_call.1} parent=1 // pred_region
      %54 = dma.done [#allocation5], 256
    $region13: #{tpu_custom_call.1} parent=1 // pred_fallthru
      _
    // Predicated region
    $region14: #{tpu_custom_call.1} parent=1 // pred_check
      _
    $region15: #{tpu_custom_call.1} parent=1 // pred_check_branch
      %56 = sbr.rel (0) target = $region17
    $region16: #{tpu_custom_call.1} parent=1 // pred_region
      %58 = dma.done [#allocation8], 256
    $region17: #{tpu_custom_call.1} parent=1 // pred_fallthru
      _
    %s59 = sadd.s32 0, 0
    %p60 = scmp.lt.s32.totalorder %s59, 0
    %s61 = scalar_select %p60, %s59, 0
    %s62 = smul.u32 2, %s61
    %s63 = sadd.s32 0, 0
    %p64 = scmp.lt.s32.totalorder %s63, 0
    %s65 = scalar_select %p64, %s63, 0
    %s66 = smul.u32 2, %s65
    %p67 = scmp.eq.s32.totalorder 0, 0
    // Predicated region
    $region18: #{tpu_custom_call.1} parent=1 // pred_check
      %p68 = pneg %p67
    $region19: #{tpu_custom_call.1} parent=1 // pred_check_branch
      %70 = sbr.rel (%p68) target = $region21
    $region20: #{tpu_custom_call.1} parent=1 // pred_region
      %71 = vst [vmem:[#allocation2] sm:$0xff] 0.0
      %72 = vst [vmem:[#allocation3] sm:$0xff] 0.0
    $region21: #{tpu_custom_call.1} parent=1 // pred_fallthru
      _
    %v73 = vld [vmem:[#allocation7] sm:$0xff]
    %v74 = vld [vmem:[#allocation7 + $0x8] sm:$0xff]
    %v75 = vld [vmem:[#allocation4] sm:$0xff]
    %v76 = vld [vmem:[#allocation4 + $0x8] sm:$0xff]
    %s77 = sadd.s32 0, 0
    %p78 = scmp.ge.s32.totalorder %s77, 0
    %p79 = scmp.lt.s32.totalorder %s77, 0
    // Predicated region
    $region22: #{tpu_custom_call.1} parent=1 // pred_check
      %p80 = pneg %p79
    $region23: #{tpu_custom_call.1} parent=1 // pred_check_branch
      %82 = sbr.rel (%p80) target = $region25
    $region24: #{tpu_custom_call.1} parent=1 // pred_region
      %vm83 = vcmp.gt.f32.partialorder %v73, 0.0
      %vm84 = vcmp.gt.f32.partialorder %v74, 0.0
      %v85 = vsub.f32 %v73, %v75
      %v86 = vsub.f32 %v74, %v76
      %v87 = vand.u32 2147483647, %v85
      %v88 = vand.u32 2147483647, %v86
      %v89 = vsel %vm83, %v87, 0.0
      %v90 = vsel %vm84, %v88, 0.0
      %v91 = vsel %vm83, 1, 0
      %v92 = vsel %vm84, 1, 0
      %v93 = vcvt.s32.f32 %v91
      %v94 = vcvt.s32.f32 %v92
      %v95 = vld [vmem:[#allocation2] sm:$0xff]
      %v96 = vadd.f32 %v89, %v90
      %v97 = vadd.f32 %v95, %v96
      %98 = vst [vmem:[#allocation2] sm:$0xff] %v97
      %v99 = vld [vmem:[#allocation3] sm:$0xff]
      %v100 = vadd.f32 %v93, %v94
      %v101 = vadd.f32 %v99, %v100
      %102 = vst [vmem:[#allocation3] sm:$0xff] %v101
    $region25: #{tpu_custom_call.1} parent=1 // pred_fallthru
      _
    // Predicated region
    $region26: #{tpu_custom_call.1} parent=1 // pred_check
      %p103 = pneg %p78
    $region27: #{tpu_custom_call.1} parent=1 // pred_check_branch
      %105 = sbr.rel (%p103) target = $region29
    $region28: #{tpu_custom_call.1} parent=1 // pred_region
      %s106 = smul.u32 %s77, 16
      %v107 = vlaneseq
      %v108 = vshrl.u32 %v107, 7
      %v109 = vadd.s32 %v108, 8
      %v110 = vstv %s106
      %v111 = vadd.s32 %v110, %v108
      %v112 = vadd.s32 %v110, %v109
      %vm113 = vcmp.gt.f32.partialorder %v73, 0.0
      %vm114 = vcmp.gt.f32.partialorder %v74, 0.0
      %vm115 = vcmp.lt.s32.totalorder %v111, 16
      %vm116 = vcmp.lt.s32.totalorder %v112, 16
      %vm117 = vmand %vm113, %vm115
      %vm118 = vmand %vm114, %vm116
      %v119 = vsub.f32 %v73, %v75
      %v120 = vsub.f32 %v74, %v76
      %v121 = vand.u32 2147483647, %v119
      %v122 = vand.u32 2147483647, %v120
      %v123 = vsel %vm117, %v121, 0.0
      %v124 = vsel %vm118, %v122, 0.0
      %v125 = vsel %vm117, 1, 0
      %v126 = vsel %vm118, 1, 0
      %v127 = vcvt.s32.f32 %v125
      %v128 = vcvt.s32.f32 %v126
      %v129 = vld [vmem:[#allocation2] sm:$0xff]
      %v130 = vadd.f32 %v123, %v124
      %v131 = vadd.f32 %v129, %v130
      %132 = vst [vmem:[#allocation2] sm:$0xff] %v131
      %v133 = vld [vmem:[#allocation3] sm:$0xff]
      %v134 = vadd.f32 %v127, %v128
      %v135 = vadd.f32 %v133, %v134
      %136 = vst [vmem:[#allocation3] sm:$0xff] %v135
    $region29: #{tpu_custom_call.1} parent=1 // pred_fallthru
      _
    // Predicated region
    $region30: #{tpu_custom_call.1} parent=1 // pred_check
      %p137 = pneg %p67
    $region31: #{tpu_custom_call.1} parent=1 // pred_check_branch
      %139 = sbr.rel (%p137) target = $region33
    $region32: #{tpu_custom_call.1} parent=1 // pred_region
      %v140 = vld [vmem:[#allocation2] sm:$0xff]
      %141 = vadd.xlane.f32.xlu0 %v140
      %v142 = vpop.xlane.xlu0 %141
      %v143 = vrot.slane %v142, 4
      %v144 = vadd.f32 %v142, %v143
      %v145 = vrot.slane %v144, 2
      %v146 = vadd.f32 %v144, %v145
      %v147 = vrot.slane %v146, 1
      %v148 = vadd.f32 %v146, %v147
      %s149 = vtos %v148
      %v150 = vstv %s149
      %vm151 = vcmask 0
      %152 = vst.msk [vmem:[#allocation9] sm:$0x1] %vm151, %v150
      %v153 = vld [vmem:[#allocation3] sm:$0xff]
      %v154 = vrot.slane %v153, 4
      %v155 = vadd.f32 %v153, %v154
      %v156 = vrot.slane %v155, 2
      %v157 = vadd.f32 %v155, %v156
      %v158 = vrot.slane %v157, 1
      %v159 = vadd.f32 %v157, %v158
      %160 = vst [vmem:[#allocation10] sm:$0x1] %v159
    $region33: #{tpu_custom_call.1} parent=1 // pred_fallthru
      _
    // Predicated region
    $region34: #{tpu_custom_call.1} parent=1 // pred_check
      _
    $region35: #{tpu_custom_call.1} parent=1 // pred_check_branch
      %162 = sbr.rel (0) target = $region37
    $region36: #{tpu_custom_call.1} parent=1 // pred_region
      %164 = vsyncadd [#allocation6], 0
      %s166 = sshll.u32 [#allocation9], 4
      %s167 = int_to_ptr.vmem [resolvable:$true] %s166
      %s168 = sshll.u32 %s2, 4
      %s169 = int_to_ptr.hbm [resolvable:$true] %s168
      %171 = dma.vmem_to_hbm [thread:$0]  %s167, 16, %s169, [#allocation6]
    $region37: #{tpu_custom_call.1} parent=1 // pred_fallthru
      _
    // Predicated region
    $region38: #{tpu_custom_call.1} parent=1 // pred_check
      _
    $region39: #{tpu_custom_call.1} parent=1 // pred_check_branch
      %173 = sbr.rel (0) target = $region41
    $region40: #{tpu_custom_call.1} parent=1 // pred_region
      %175 = vsyncadd [#allocation11], 0
      %s177 = sshll.u32 [#allocation10], 4
      %s178 = int_to_ptr.vmem [resolvable:$true] %s177
      %s179 = sshll.u32 %s3, 4
      %s180 = int_to_ptr.hbm [resolvable:$true] %s179
      %182 = dma.vmem_to_hbm [thread:$0]  %s178, 16, %s180, [#allocation11]
    $region41: #{tpu_custom_call.1} parent=1 // pred_fallthru
      _
    // Predicated region
    $region42: #{tpu_custom_call.1} parent=1 // pred_check
      _
    $region43: #{tpu_custom_call.1} parent=1 // pred_check_branch
      %184 = sbr.rel (0) target = $region45
    $region44: #{tpu_custom_call.1} parent=1 // pred_region
      %186 = dma.done [#allocation6], 16
    $region45: #{tpu_custom_call.1} parent=1 // pred_fallthru
      _
    // Predicated region
    $region46: #{tpu_custom_call.1} parent=1 // pred_check
      _
    $region47: #{tpu_custom_call.1} parent=1 // pred_check_branch
      %188 = sbr.rel (0) target = $region49
    $region48: #{tpu_custom_call.1} parent=1 // pred_region
      %190 = dma.done [#allocation11], 16
    $region49: #{tpu_custom_call.1} parent=1 // pred_fallthru
      _
    %191 = vsyncpa [#allocation5], 1
    %192 = vsyncpa [#allocation8], 1
    %193 = vsyncpa [#allocation6], 1
    %194 = vsyncpa [#allocation11], 1

</llo_original>
